<compile_context>
chip_gen: v7x
topology: tpu7x:2x2x1
jax: 0.10.0
libtpu: 0.0.40
codegen_flags: <defaults>
</compile_context>

<pallas_src>
import functools
import math

import jax
import jax.numpy as jnp
from jax.experimental import pallas as pl
from jax.experimental.pallas import tpu as pltpu

_LANES = 128
_BLOCK_ROWS = 2048  # (2048, 128) f32 block = 1 MiB per input per pipeline buffer
_NUM_SLICES = 2     # leading "parallel" axis: 2 TCs on v7x, harmless elsewhere


def _to_slab(a):
    """Flatten to a lane-dense (rows, 128) slab in the array's native dtype."""
    flat = a.reshape(-1)
    pad = (-flat.shape[0]) % _LANES
    if pad:
        # Only taken when numel is not lane-aligned; zero padding does not
        # change either sum.
        flat = jnp.concatenate([flat, jnp.zeros((pad,), flat.dtype)])
    return flat.reshape(-1, _LANES)


def _mse_small_kernel(x_ref, g_ref, o_ref, *, inv_numel):
    """Single-block path: whole (rows, 128) slabs fit in one VMEM tile."""
    d = jnp.sum(
        x_ref[...].astype(jnp.float32) - g_ref[...].astype(jnp.float32),
        keepdims=True,
    )  # shape (1, 1)
    o_ref[...] = d * d * jnp.float32(inv_numel)


def _mse_big_kernel(x_ref, g_ref, o_ref, acc_ref, *, steps, block_rows, rows, ragged):
    """Streaming path: grid = (slice, step); per-slice (8,128) accumulator."""
    c = pl.program_id(0)  # parallel slice (megacore)
    s = pl.program_id(1)  # reduction step (arbitrary)

    @pl.when(s == 0)
    def _():
        acc_ref[...] = jnp.zeros_like(acc_ref)

    d = x_ref[...].astype(jnp.float32) - g_ref[...].astype(jnp.float32)

    if ragged:
        # Mask rows past the true end of the slab (covers both the partial
        # last block and duplicated clamped blocks from the index_map).
        row_start = (c * steps + s) * block_rows
        row_ids = row_start + jax.lax.broadcasted_iota(
            jnp.int32, (block_rows, _LANES), 0
        )
        d = jnp.where(row_ids < rows, d, jnp.float32(0.0))

    # Keep the hot-loop reduction lane/sublane shaped: grouping 8-row chunks and
    # summing over the leading axis is pure VPU adds (no per-tile XLU reduce).
    acc_ref[...] += jnp.sum(d.reshape(block_rows // 8, 8, _LANES), axis=0)

    @pl.when(s == steps - 1)
    def _():
        o_ref[...] = acc_ref[...]


def mse_scalar_loss(x, gt_map):
    """Pallas implementation of MSEScalarLoss.forward(x, gt_map)."""
    numel = math.prod(x.shape)
    assert math.prod(gt_map.shape) == numel, (
        "x and gt_map must have the same number of elements"
    )

    x2 = _to_slab(x)
    g2 = _to_slab(gt_map)
    rows = x2.shape[0]

    # ---- small-input fast path: one full-array block, grid=(1,) -------------
    if rows <= _BLOCK_ROWS:
        out = pl.pallas_call(
            functools.partial(_mse_small_kernel, inv_numel=1.0 / numel),
            out_shape=jax.ShapeDtypeStruct((1, 1), jnp.float32),
            grid_spec=pltpu.PrefetchScalarGridSpec(
                num_scalar_prefetch=0,
                grid=(1,),
                in_specs=[
                    pl.BlockSpec(x2.shape, lambda i: (0, 0)),
                    pl.BlockSpec(g2.shape, lambda i: (0, 0)),
                ],
                out_specs=pl.BlockSpec((1, 1), lambda i: (0, 0)),
            ),
        )(x2, g2)
        return out[0, 0]

    # ---- large-input streaming path -----------------------------------------
    total_blocks = -(-rows // _BLOCK_ROWS)          # >= 2 here
    num_slices = _NUM_SLICES
    steps = -(-total_blocks // num_slices)
    # ragged => last block partial and/or clamped duplicate blocks exist.
    ragged = (num_slices * steps * _BLOCK_ROWS) != rows

    if ragged:
        def in_index_map(c, s):
            return (jnp.minimum(c * steps + s, total_blocks - 1), 0)
    else:
        def in_index_map(c, s):
            return (c * steps + s, 0)

    kernel = functools.partial(
        _mse_big_kernel,
        steps=steps,
        block_rows=_BLOCK_ROWS,
        rows=rows,
        ragged=ragged,
    )

    partials = pl.pallas_call(
        kernel,
        out_shape=jax.ShapeDtypeStruct((num_slices * 8, _LANES), jnp.float32),
        grid_spec=pltpu.PrefetchScalarGridSpec(
            num_scalar_prefetch=0,
            grid=(num_slices, steps),
            in_specs=[
                pl.BlockSpec((_BLOCK_ROWS, _LANES), in_index_map),
                pl.BlockSpec((_BLOCK_ROWS, _LANES), in_index_map),
            ],
            out_specs=pl.BlockSpec((8, _LANES), lambda c, s: (c, 0)),
            scratch_shapes=[pltpu.VMEM((8, _LANES), jnp.float32)],
        ),
        compiler_params=pltpu.CompilerParams(
            dimension_semantics=("parallel", "arbitrary"),
            vmem_limit_bytes=32 * 1024 * 1024,
        ),
    )(x2, g2)

    # Single cross-lane reduce + the scalar square/divide happen once, here.
    diff = jnp.sum(partials)
    return (diff * diff) / numel


if __name__ == "__main__":
    key = jax.random.PRNGKey(0)
    k1, k2, k3, k4, k5, k6 = jax.random.split(key, 6)

    def reference(x, g):
        return (x.sum() - g.sum()) ** 2 / x.size

    # 1) Small, lane-aligned input (single-block fast path).
    x = jax.random.normal(k1, (2, 1, 16, 16), dtype=jnp.float32)
    g = jax.random.normal(k2, (2, 1, 16, 16), dtype=jnp.float32)
    loss = mse_scalar_loss(x, g)
    jax.block_until_ready(loss)
    assert jnp.allclose(loss, reference(x, g), rtol=1e-5, atol=1e-5), (
        loss, reference(x, g))

    # 2) Small, non-lane-aligned input (exercises the padding fallback).
    x = jax.random.normal(k3, (3, 1, 13, 11), dtype=jnp.float32)
    g = jax.random.normal(k4, (3, 1, 13, 11), dtype=jnp.float32)
    loss = mse_scalar_loss(x, g)
    jax.block_until_ready(loss)
    assert jnp.allclose(loss, reference(x, g), rtol=1e-5, atol=1e-5), (
        loss, reference(x, g))

    # 3) Larger input: tiled two-slice streaming path with a ragged tail
    #    (offset on g avoids near-cancellation so the f32 check is stable).
    x = jax.random.normal(k5, (2, 4, 320, 320), dtype=jnp.float32)
    g = jax.random.normal(k6, (2, 4, 320, 320), dtype=jnp.float32) + 0.05
    loss = mse_scalar_loss(x, g)
    jax.block_until_ready(loss)
    assert jnp.allclose(loss, reference(x, g), rtol=1e-4, atol=1e-4), (
        loss, reference(x, g))

    print("KERNEL_OK")
</pallas_src>

<mosaic_0001>
module attributes {stable_mosaic.version = 11 : i64} {
  func.func @_mse_small_kernel(%arg0: i32, %arg1: memref<4x128xf32, #tpu.memory_space<vmem>>, %arg2: memref<4x128xf32, #tpu.memory_space<vmem>>, %arg3: memref<1x1xf32, #tpu.memory_space<vmem>>) attributes {dimension_semantics = [#tpu.dimension_semantics<arbitrary>], iteration_bounds = array<i64: 1>, scalar_prefetch = 0 : i64, scratch_operands = 0 : i64, tpu.core_type = #tpu.core_type<tc>, window_params = [{pipeline_mode = #tpu.pipeline_mode<synchronous>, transform_indices = @transform_0, window_bounds = array<i64: 4, 128>}, {pipeline_mode = #tpu.pipeline_mode<synchronous>, transform_indices = @transform_1, window_bounds = array<i64: 4, 128>}, {pipeline_mode = #tpu.pipeline_mode<synchronous>, transform_indices = @transform_2, window_bounds = array<i64: 1, 1>}]} {
    %c0 = arith.constant 0 : index
    %c0_0 = arith.constant 0 : index
    %0 = vector.load %arg1[%c0, %c0_0] : memref<4x128xf32, #tpu.memory_space<vmem>>, vector<4x128xf32>
    %c0_1 = arith.constant 0 : index
    %c0_2 = arith.constant 0 : index
    %1 = vector.load %arg2[%c0_1, %c0_2] : memref<4x128xf32, #tpu.memory_space<vmem>>, vector<4x128xf32>
    %2 = arith.subf %0, %1 : vector<4x128xf32>
    %3 = vector.shape_cast %2 : vector<4x128xf32> to vector<1x4x128xf32>
    %cst = arith.constant dense<0.000000e+00> : vector<1xf32>
    %4 = vector.multi_reduction <add>, %3, %cst [1, 2] : vector<1x4x128xf32> to vector<1xf32>
    %5 = vector.shape_cast %4 : vector<1xf32> to vector<1x1x1xf32>
    %6 = vector.extract %5[0, 0, 0] : f32 from vector<1x1x1xf32>
    %7 = vector.broadcast %6 : f32 to vector<1x1xf32>
    %8 = arith.mulf %7, %7 : vector<1x1xf32>
    %cst_3 = arith.constant 0.001953125 : f32
    %9 = vector.broadcast %cst_3 : f32 to vector<1x1xf32>
    %10 = arith.mulf %8, %9 : vector<1x1xf32>
    %c0_4 = arith.constant 0 : index
    %c0_5 = arith.constant 0 : index
    %11 = vector.load %arg3[%c0_4, %c0_5] : memref<1x1xf32, #tpu.memory_space<vmem>>, vector<1x1xf32>
    tpu.vector_store %arg3[%c0_4, %c0_5], %10 {strides = array<i32>} : memref<1x1xf32, #tpu.memory_space<vmem>>, vector<1x1xf32>,
    return
  }
  func.func @transform_0(%arg0: i32) -> (i32, i32) {
    %c0_i32 = arith.constant 0 : i32
    %c0_i32_0 = arith.constant 0 : i32
    %c0_i32_1 = arith.constant 0 : i32
    return %c0_i32, %c0_i32_0 : i32, i32
  }
  func.func @transform_1(%arg0: i32) -> (i32, i32) {
    %c0_i32 = arith.constant 0 : i32
    %c0_i32_0 = arith.constant 0 : i32
    %c0_i32_1 = arith.constant 0 : i32
    return %c0_i32, %c0_i32_0 : i32, i32
  }
  func.func @transform_2(%arg0: i32) -> (i32, i32) {
    %c0_i32 = arith.constant 0 : i32
    %c0_i32_0 = arith.constant 0 : i32
    %c0_i32_1 = arith.constant 0 : i32
    return %c0_i32, %c0_i32_0 : i32, i32
  }
}

</mosaic_0001>

<llo_original>
// kernel: tpu_custom_call.1
$region0: #{tpu_custom_call.1}
  #allocation0 [shape = 'u32[]', space=smem, size = 0x4, offset = 0x4, fixed_abs, tag = 'smem constant byte address 0x4 - core index']
  #allocation1 [shape = 'u32[144,128]{1,0:T(1,128)}', space=vmem, size = 0x12000, scoped, tag = 'internal scratch']
  %s0 = inlined_call_operand.hbm [shape: f32[4,128], index: 0, kind: input, shape index: {}]
  %s1 = inlined_call_operand.hbm [shape: f32[4,128], index: 1, kind: input, shape index: {}]
  %s2 = inlined_call_operand.hbm [shape: f32[1,1], index: 2, kind: output, shape index: {}]
  %s3 = sld [smem:[#allocation0]]
  $region26: #{tpu_custom_call.1} parent=0
    _
  %s5 = ssub.s32 1, %s3
  %s6 = scalar_select 0, %s5, %s3
  $region1: #{tpu_custom_call.1} parent=0
    #allocation2 [shape = 'u8[2048]{0}', space=vmem, size = 0x800, scoped, tag = 'input window, operand 0, single buffered']
    #allocation3 [shape = 's32[1]{0}', space=sflag, size = 0x4, scoped, tag = 'scoped memory for tpu_custom_call.1']
    #allocation4 [shape = 's32[1]{0}', space=sflag, size = 0x4, scoped, tag = 'scoped memory for tpu_custom_call.1']
    #allocation5 [shape = 'u8[2048]{0}', space=vmem, size = 0x800, scoped, tag = 'input window, operand 1, single buffered']
    #allocation6 [shape = 's32[1]{0}', space=sflag, size = 0x4, scoped, tag = 'scoped memory for tpu_custom_call.1']
    #allocation7 [shape = 'u8[512]{0}', space=vmem, size = 0x400, scoped, tag = 'output window, operand 0, single buffered']
    %7 = vsyncpa [#allocation3], 0
    %8 = vsyncpa [#allocation6], 0
    %9 = vsyncpa [#allocation4], 0
    // Predicated region
    $region2: #{tpu_custom_call.1} parent=1 // pred_check
      _
    $region3: #{tpu_custom_call.1} parent=1 // pred_check_branch
      %11 = sbr.rel (0) target = $region5
    $region4: #{tpu_custom_call.1} parent=1 // pred_region
      %s13 = ssub.s32 64, 64
      %14 = vsyncadd [#allocation3], %s13
      %s16 = sshll.u32 [#allocation2], 4
      %s17 = int_to_ptr.vmem [resolvable:$true] %s16
      %19 = dma.hbm_to_vmem [thread:$0]  %s0, 64, %s17, [#allocation3]
    $region5: #{tpu_custom_call.1} parent=1 // pred_fallthru
      _
    // Predicated region
    $region6: #{tpu_custom_call.1} parent=1 // pred_check
      _
    $region7: #{tpu_custom_call.1} parent=1 // pred_check_branch
      %21 = sbr.rel (0) target = $region9
    $region8: #{tpu_custom_call.1} parent=1 // pred_region
      %s23 = ssub.s32 64, 64
      %24 = vsyncadd [#allocation6], %s23
      %s26 = sshll.u32 [#allocation5], 4
      %s27 = int_to_ptr.vmem [resolvable:$true] %s26
      %29 = dma.hbm_to_vmem [thread:$0]  %s1, 64, %s27, [#allocation6]
    $region9: #{tpu_custom_call.1} parent=1 // pred_fallthru
      _
    // Predicated region
    $region10: #{tpu_custom_call.1} parent=1 // pred_check
      _
    $region11: #{tpu_custom_call.1} parent=1 // pred_check_branch
      %31 = sbr.rel (0) target = $region13
    $region12: #{tpu_custom_call.1} parent=1 // pred_region
      %32 = dma.done [#allocation3], 64
    $region13: #{tpu_custom_call.1} parent=1 // pred_fallthru
      _
    // Predicated region
    $region14: #{tpu_custom_call.1} parent=1 // pred_check
      _
    $region15: #{tpu_custom_call.1} parent=1 // pred_check_branch
      %34 = sbr.rel (0) target = $region17
    $region16: #{tpu_custom_call.1} parent=1 // pred_region
      %35 = dma.done [#allocation6], 64
    $region17: #{tpu_custom_call.1} parent=1 // pred_fallthru
      _
    %v36 = vld [vmem:[#allocation2] sm:$0xf]
    %v37 = vld [vmem:[#allocation5] sm:$0xf]
    %v38 = vsub.f32 %v36, %v37
    %vm39 = vcmask 1043456
    %v40 = vsel %vm39, %v38, 0.0
    %41 = vadd.xlane.f32.xlu0 %v40
    %v42 = vpop.xlane.xlu0 %41
    %v43 = vrot.slane %v42, 4
    %v44 = vadd.f32 %v42, %v43
    %v45 = vrot.slane %v44, 2
    %v46 = vadd.f32 %v44, %v45
    %v47 = vrot.slane %v46, 1
    %v48 = vadd.f32 %v46, %v47
    %s49 = vtos %v48
    %v50 = vstv %s49
    %v51 = vmul.f32 %v50, %v50
    %v52 = vmul.f32 %v51, 0.001953125
    %vm53 = vcmask 0
    %54 = vst.msk [vmem:[#allocation7] sm:$0x1] %vm53, %v52
    // Predicated region
    $region18: #{tpu_custom_call.1} parent=1 // pred_check
      _
    $region19: #{tpu_custom_call.1} parent=1 // pred_check_branch
      %56 = sbr.rel (0) target = $region21
    $region20: #{tpu_custom_call.1} parent=1 // pred_region
      %s58 = ssub.s32 16, 16
      %59 = vsyncadd [#allocation4], %s58
      %s61 = sshll.u32 [#allocation7], 4
      %s62 = int_to_ptr.vmem [resolvable:$true] %s61
      %64 = dma.vmem_to_hbm [thread:$0]  %s62, 16, %s2, [#allocation4]
    $region21: #{tpu_custom_call.1} parent=1 // pred_fallthru
      _
    // Predicated region
    $region22: #{tpu_custom_call.1} parent=1 // pred_check
      _
    $region23: #{tpu_custom_call.1} parent=1 // pred_check_branch
      %66 = sbr.rel (0) target = $region25
    $region24: #{tpu_custom_call.1} parent=1 // pred_region
      %67 = dma.done [#allocation4], 16
    $region25: #{tpu_custom_call.1} parent=1 // pred_fallthru
      _
    %68 = vsyncpa [#allocation3], 1
    %69 = vsyncpa [#allocation6], 1
    %70 = vsyncpa [#allocation4], 1

</llo_original>
